<compile_context>
chip_gen: v5e
topology: v5e:2x2
jax: 0.10.0
libtpu: 0.0.40
codegen_flags: <defaults>
</compile_context>

<pallas_src>
import functools

import jax
import jax.numpy as jnp
from jax.experimental import pallas as pl
from jax.experimental.pallas import tpu as pltpu


def actor_kernel(x_ref,
                 w1_ref, b1_ref,
                 w2_ref, b2_ref,
                 w3_ref, b3_ref,
                 w4_ref, b4_ref,
                 o_ref):
    """Whole-network MLP forward on one batch tile: 4 matmuls, 3 ReLUs.

    Weights are (in, out); biases are (1, out) and broadcast over sublanes.
    MXU accumulation is always f32 (preferred_element_type)."""
    h = x_ref[...]

    h = jnp.dot(h.astype(w1_ref.dtype), w1_ref[...],
                preferred_element_type=jnp.float32) + b1_ref[...]
    h = jnp.maximum(h, 0.0)

    h = jnp.dot(h.astype(w2_ref.dtype), w2_ref[...],
                preferred_element_type=jnp.float32) + b2_ref[...]
    h = jnp.maximum(h, 0.0)

    h = jnp.dot(h.astype(w3_ref.dtype), w3_ref[...],
                preferred_element_type=jnp.float32) + b3_ref[...]
    h = jnp.maximum(h, 0.0)

    o_ref[...] = (jnp.dot(h.astype(w4_ref.dtype), w4_ref[...],
                          preferred_element_type=jnp.float32)
                  + b4_ref[...]).astype(o_ref.dtype)


def init_actor_params(key, state_dim, action_dim, hidden_width0, hidden_width1,
                      weight_dtype=jnp.float32):
    """PyTorch-Linear-style uniform init, stored in kernel-native layout:
    weights as (in_features, out_features), biases as (1, out_features).

    Set weight_dtype=jnp.bfloat16 on v6e/v7x to halve weight bytes (biases and
    accumulation stay f32)."""
    dims = [(state_dim, hidden_width0),
            (hidden_width0, hidden_width1),
            (hidden_width1, hidden_width1),
            (hidden_width1, action_dim)]
    params = []
    for fan_in, fan_out in dims:
        kw, kb, key = jax.random.split(key, 3)
        bound = 1.0 / (fan_in ** 0.5)
        w = jax.random.uniform(kw, (fan_in, fan_out), jnp.float32, -bound, bound)
        b = jax.random.uniform(kb, (1, fan_out), jnp.float32, -bound, bound)
        params.append((w.astype(weight_dtype), b))
    return params


@functools.partial(jax.jit, static_argnames=("tile_b",))
def actor_forward(state, params, tile_b=512):
    """state: [B, state_dim] float32 -> [B, action_dim] float32."""
    B, state_dim = state.shape
    (w1, b1), (w2, b2), (w3, b3), (w4, b4) = params
    action_dim = w4.shape[1]

    tile_b = min(tile_b, B)
    grid = (pl.cdiv(B, tile_b),)

    def batch_tiled(ncols):
        # Tiled along batch; feature axis is full-extent (maps to lanes).
        return pl.BlockSpec((tile_b, ncols), lambda i: (i, 0))

    def resident(arr):
        # Same block for every grid step -> stays VMEM-resident.
        return pl.BlockSpec(arr.shape, lambda i: (0, 0))

    in_specs = [
        batch_tiled(state_dim),
        resident(w1), resident(b1),
        resident(w2), resident(b2),
        resident(w3), resident(b3),
        resident(w4), resident(b4),
    ]

    return pl.pallas_call(
        actor_kernel,
        out_shape=jax.ShapeDtypeStruct((B, action_dim), jnp.float32),
        grid=grid,
        in_specs=in_specs,
        out_specs=batch_tiled(action_dim),
        compiler_params=pltpu.CompilerParams(
            dimension_semantics=("parallel",)),  # v7x: shard batch over 2 TCs
    )(state, w1, b1, w2, b2, w3, b3, w4, b4)


if __name__ == "__main__":
    # Small shapes consistent with the module's forward.
    B = 8
    state_dim = 16
    hidden_width0 = 32
    hidden_width1 = 32
    action_dim = 4
    max_action = 1.0  # stored by the module but unused in forward

    key = jax.random.PRNGKey(0)
    k_state, k_params = jax.random.split(key)

    state = jax.random.normal(k_state, (B, state_dim), jnp.float32)
    params = init_actor_params(k_params, state_dim, action_dim,
                               hidden_width0, hidden_width1)

    out = actor_forward(state, params)
    out = jax.block_until_ready(out)

    # Pure-JAX reference of the same math (params already (in,out)/(1,out)).
    def ref(x, params):
        h = x
        for i, (w, b) in enumerate(params):
            h = h.astype(jnp.float32) @ w.astype(jnp.float32) + b
            if i < len(params) - 1:
                h = jnp.maximum(h, 0.0)
        return h

    expected = ref(state, params)
    assert out.shape == (B, action_dim)
    assert jnp.allclose(out, expected, atol=1e-5, rtol=1e-5)

    print("KERNEL_OK")
</pallas_src>

<mosaic_0001>
module attributes {stable_mosaic.version = 11 : i64} {
  func.func @actor_kernel(%arg0: i32, %arg1: memref<8x16xf32, #tpu.memory_space<vmem>>, %arg2: memref<16x32xf32, #tpu.memory_space<vmem>>, %arg3: memref<1x32xf32, #tpu.memory_space<vmem>>, %arg4: memref<32x32xf32, #tpu.memory_space<vmem>>, %arg5: memref<1x32xf32, #tpu.memory_space<vmem>>, %arg6: memref<32x32xf32, #tpu.memory_space<vmem>>, %arg7: memref<1x32xf32, #tpu.memory_space<vmem>>, %arg8: memref<32x4xf32, #tpu.memory_space<vmem>>, %arg9: memref<1x4xf32, #tpu.memory_space<vmem>>, %arg10: memref<8x4xf32, #tpu.memory_space<vmem>>) attributes {dimension_semantics = [#tpu.dimension_semantics<parallel>], iteration_bounds = array<i64: 1>, scalar_prefetch = 0 : i64, scratch_operands = 0 : i64, tpu.core_type = #tpu.core_type<tc>, window_params = [{transform_indices = @transform_0, window_bounds = array<i64: 8, 16>}, {pipeline_mode = #tpu.pipeline_mode<synchronous>, transform_indices = @transform_1, window_bounds = array<i64: 16, 32>}, {pipeline_mode = #tpu.pipeline_mode<synchronous>, transform_indices = @transform_2, window_bounds = array<i64: 1, 32>}, {pipeline_mode = #tpu.pipeline_mode<synchronous>, transform_indices = @transform_3, window_bounds = array<i64: 32, 32>}, {pipeline_mode = #tpu.pipeline_mode<synchronous>, transform_indices = @transform_4, window_bounds = array<i64: 1, 32>}, {pipeline_mode = #tpu.pipeline_mode<synchronous>, transform_indices = @transform_5, window_bounds = array<i64: 32, 32>}, {pipeline_mode = #tpu.pipeline_mode<synchronous>, transform_indices = @transform_6, window_bounds = array<i64: 1, 32>}, {pipeline_mode = #tpu.pipeline_mode<synchronous>, transform_indices = @transform_7, window_bounds = array<i64: 32, 4>}, {pipeline_mode = #tpu.pipeline_mode<synchronous>, transform_indices = @transform_8, window_bounds = array<i64: 1, 4>}, {transform_indices = @transform_9, window_bounds = array<i64: 8, 4>}]} {
    %c0 = arith.constant 0 : index
    %c0_0 = arith.constant 0 : index
    %0 = vector.load %arg1[%c0, %c0_0] : memref<8x16xf32, #tpu.memory_space<vmem>>, vector<8x16xf32>
    %c0_1 = arith.constant 0 : index
    %c0_2 = arith.constant 0 : index
    %1 = vector.load %arg2[%c0_1, %c0_2] : memref<16x32xf32, #tpu.memory_space<vmem>>, vector<16x32xf32>
    %cst = arith.constant dense<0.000000e+00> : vector<8x32xf32>
    %2 = tpu.matmul %0, %1, %cst {dimension_numbers = #tpu.dot_dimension_numbers<[1], [0], [0], [1], [0, 0, 1, 1], [], []>} : vector<8x16xf32>, vector<16x32xf32>, vector<8x32xf32> -> vector<8x32xf32>
    %c0_3 = arith.constant 0 : index
    %c0_4 = arith.constant 0 : index
    %3 = vector.load %arg3[%c0_3, %c0_4] : memref<1x32xf32, #tpu.memory_space<vmem>>, vector<1x32xf32>
    %4 = vector.broadcast %3 : vector<1x32xf32> to vector<8x32xf32>
    %5 = arith.addf %2, %4 : vector<8x32xf32>
    %cst_5 = arith.constant 0.000000e+00 : f32
    %6 = vector.broadcast %cst_5 : f32 to vector<8x32xf32>
    %7 = arith.maximumf %5, %6 : vector<8x32xf32>
    %c0_6 = arith.constant 0 : index
    %c0_7 = arith.constant 0 : index
    %8 = vector.load %arg4[%c0_6, %c0_7] : memref<32x32xf32, #tpu.memory_space<vmem>>, vector<32x32xf32>
    %cst_8 = arith.constant dense<0.000000e+00> : vector<8x32xf32>
    %9 = tpu.matmul %7, %8, %cst_8 {dimension_numbers = #tpu.dot_dimension_numbers<[1], [0], [0], [1], [0, 0, 1, 1], [], []>} : vector<8x32xf32>, vector<32x32xf32>, vector<8x32xf32> -> vector<8x32xf32>
    %c0_9 = arith.constant 0 : index
    %c0_10 = arith.constant 0 : index
    %10 = vector.load %arg5[%c0_9, %c0_10] : memref<1x32xf32, #tpu.memory_space<vmem>>, vector<1x32xf32>
    %11 = vector.broadcast %10 : vector<1x32xf32> to vector<8x32xf32>
    %12 = arith.addf %9, %11 : vector<8x32xf32>
    %cst_11 = arith.constant 0.000000e+00 : f32
    %13 = vector.broadcast %cst_11 : f32 to vector<8x32xf32>
    %14 = arith.maximumf %12, %13 : vector<8x32xf32>
    %c0_12 = arith.constant 0 : index
    %c0_13 = arith.constant 0 : index
    %15 = vector.load %arg6[%c0_12, %c0_13] : memref<32x32xf32, #tpu.memory_space<vmem>>, vector<32x32xf32>
    %cst_14 = arith.constant dense<0.000000e+00> : vector<8x32xf32>
    %16 = tpu.matmul %14, %15, %cst_14 {dimension_numbers = #tpu.dot_dimension_numbers<[1], [0], [0], [1], [0, 0, 1, 1], [], []>} : vector<8x32xf32>, vector<32x32xf32>, vector<8x32xf32> -> vector<8x32xf32>
    %c0_15 = arith.constant 0 : index
    %c0_16 = arith.constant 0 : index
    %17 = vector.load %arg7[%c0_15, %c0_16] : memref<1x32xf32, #tpu.memory_space<vmem>>, vector<1x32xf32>
    %18 = vector.broadcast %17 : vector<1x32xf32> to vector<8x32xf32>
    %19 = arith.addf %16, %18 : vector<8x32xf32>
    %cst_17 = arith.constant 0.000000e+00 : f32
    %20 = vector.broadcast %cst_17 : f32 to vector<8x32xf32>
    %21 = arith.maximumf %19, %20 : vector<8x32xf32>
    %c0_18 = arith.constant 0 : index
    %c0_19 = arith.constant 0 : index
    %22 = vector.load %arg8[%c0_18, %c0_19] : memref<32x4xf32, #tpu.memory_space<vmem>>, vector<32x4xf32>
    %cst_20 = arith.constant dense<0.000000e+00> : vector<8x4xf32>
    %23 = tpu.matmul %21, %22, %cst_20 {dimension_numbers = #tpu.dot_dimension_numbers<[1], [0], [0], [1], [0, 0, 1, 1], [], []>} : vector<8x32xf32>, vector<32x4xf32>, vector<8x4xf32> -> vector<8x4xf32>
    %c0_21 = arith.constant 0 : index
    %c0_22 = arith.constant 0 : index
    %24 = vector.load %arg9[%c0_21, %c0_22] : memref<1x4xf32, #tpu.memory_space<vmem>>, vector<1x4xf32>
    %25 = vector.broadcast %24 : vector<1x4xf32> to vector<8x4xf32>
    %26 = arith.addf %23, %25 : vector<8x4xf32>
    %c0_23 = arith.constant 0 : index
    %c0_24 = arith.constant 0 : index
    %27 = vector.load %arg10[%c0_23, %c0_24] : memref<8x4xf32, #tpu.memory_space<vmem>>, vector<8x4xf32>
    tpu.vector_store %arg10[%c0_23, %c0_24], %26 {strides = array<i32>} : memref<8x4xf32, #tpu.memory_space<vmem>>, vector<8x4xf32>,
    return
  }
  func.func @transform_0(%arg0: i32) -> (i32, i32) {
    %c0_i32 = arith.constant 0 : i32
    %c0_i32_0 = arith.constant 0 : i32
    return %arg0, %c0_i32 : i32, i32
  }
  func.func @transform_1(%arg0: i32) -> (i32, i32) {
    %c0_i32 = arith.constant 0 : i32
    %c0_i32_0 = arith.constant 0 : i32
    %c0_i32_1 = arith.constant 0 : i32
    return %c0_i32, %c0_i32_0 : i32, i32
  }
  func.func @transform_2(%arg0: i32) -> (i32, i32) {
    %c0_i32 = arith.constant 0 : i32
    %c0_i32_0 = arith.constant 0 : i32
    %c0_i32_1 = arith.constant 0 : i32
    return %c0_i32, %c0_i32_0 : i32, i32
  }
  func.func @transform_3(%arg0: i32) -> (i32, i32) {
    %c0_i32 = arith.constant 0 : i32
    %c0_i32_0 = arith.constant 0 : i32
    %c0_i32_1 = arith.constant 0 : i32
    return %c0_i32, %c0_i32_0 : i32, i32
  }
  func.func @transform_4(%arg0: i32) -> (i32, i32) {
    %c0_i32 = arith.constant 0 : i32
    %c0_i32_0 = arith.constant 0 : i32
    %c0_i32_1 = arith.constant 0 : i32
    return %c0_i32, %c0_i32_0 : i32, i32
  }
  func.func @transform_5(%arg0: i32) -> (i32, i32) {
    %c0_i32 = arith.constant 0 : i32
    %c0_i32_0 = arith.constant 0 : i32
    %c0_i32_1 = arith.constant 0 : i32
    return %c0_i32, %c0_i32_0 : i32, i32
  }
  func.func @transform_6(%arg0: i32) -> (i32, i32) {
    %c0_i32 = arith.constant 0 : i32
    %c0_i32_0 = arith.constant 0 : i32
    %c0_i32_1 = arith.constant 0 : i32
    return %c0_i32, %c0_i32_0 : i32, i32
  }
  func.func @transform_7(%arg0: i32) -> (i32, i32) {
    %c0_i32 = arith.constant 0 : i32
    %c0_i32_0 = arith.constant 0 : i32
    %c0_i32_1 = arith.constant 0 : i32
    return %c0_i32, %c0_i32_0 : i32, i32
  }
  func.func @transform_8(%arg0: i32) -> (i32, i32) {
    %c0_i32 = arith.constant 0 : i32
    %c0_i32_0 = arith.constant 0 : i32
    %c0_i32_1 = arith.constant 0 : i32
    return %c0_i32, %c0_i32_0 : i32, i32
  }
  func.func @transform_9(%arg0: i32) -> (i32, i32) {
    %c0_i32 = arith.constant 0 : i32
    %c0_i32_0 = arith.constant 0 : i32
    return %arg0, %c0_i32 : i32, i32
  }
}

</mosaic_0001>

<llo_original>
// kernel: actor_forward.1
$region0: #{actor_forward.1}
  #allocation0 [shape = 'u32[]', space=smem, size = 0x4, offset = 0x4, fixed_abs, tag = 'smem constant byte address 0x4 - core index']
  #allocation1 [shape = 'u32[72,128]{1,0:T(1,128)}', space=vmem, size = 0x9000, scoped, tag = 'internal scratch']
  %s0 = inlined_call_operand.hbm [shape: f32[8,16], index: 0, kind: input, shape index: {}]
  %s1 = inlined_call_operand.hbm [shape: f32[16,32], index: 1, kind: input, shape index: {}]
  %s2 = inlined_call_operand.vmem [shape: f32[1,32], index: 2, kind: input, shape index: {}]
  %s3 = inlined_call_operand.vmem [shape: f32[32,32], index: 3, kind: input, shape index: {}]
  %s4 = inlined_call_operand.vmem [shape: f32[1,32], index: 4, kind: input, shape index: {}]
  %s5 = inlined_call_operand.hbm [shape: f32[32,32], index: 5, kind: input, shape index: {}]
  %s6 = inlined_call_operand.vmem [shape: f32[1,32], index: 6, kind: input, shape index: {}]
  %s7 = inlined_call_operand.vmem [shape: f32[32,4], index: 7, kind: input, shape index: {}]
  %s8 = inlined_call_operand.vmem [shape: f32[1,4], index: 8, kind: input, shape index: {}]
  %s9 = inlined_call_operand.vmem [shape: f32[8,4], index: 9, kind: output, shape index: {}]
  %s10 = sld [smem:[#allocation0]]
  $region58: #{actor_forward.1} parent=0
    _
  %s12 = ssub.s32 1, %s10
  %s13 = scalar_select 0, %s12, %s10
  $region1: #{actor_forward.1} parent=0
    #allocation2 [shape = 'u8[4096]{0}', space=vmem, size = 0x1000, scoped, tag = 'input window, operand 0, single buffered']
    #allocation3 [shape = 's32[1]{0}', space=sflag, size = 0x4, scoped, tag = 'scoped memory for actor_forward.1']
    #allocation4 [shape = 'u8[8192]{0}', space=vmem, size = 0x2000, scoped, tag = 'input window, operand 1, single buffered']
    #allocation5 [shape = 's32[1]{0}', space=sflag, size = 0x4, scoped, tag = 'scoped memory for actor_forward.1']
    #allocation6 [shape = 'u8[16384]{0}', space=vmem, size = 0x4000, scoped, tag = 'input window, operand 5, single buffered']
    %14 = vsyncpa [#allocation3], 0
    %15 = vsyncpa [#allocation5], 0
    // Predicated region
    $region2: #{actor_forward.1} parent=1 // pred_check
      _
    $region3: #{actor_forward.1} parent=1 // pred_check_branch
      %17 = sbr.rel (0) target = $region5
    $region4: #{actor_forward.1} parent=1 // pred_region
      %19 = vsyncadd [#allocation3], 0
      %s21 = sshll.u32 %s0, 4
      %s22 = int_to_ptr.hbm [resolvable:$true] %s21
      %s23 = sshll.u32 [#allocation2], 4
      %s24 = int_to_ptr.vmem [resolvable:$true] %s23
      %26 = dma.hbm_to_vmem [thread:$0]  %s22, 128, %s24, [#allocation3]
    $region5: #{actor_forward.1} parent=1 // pred_fallthru
      _
    // Predicated region
    $region6: #{actor_forward.1} parent=1 // pred_check
      _
    $region7: #{actor_forward.1} parent=1 // pred_check_branch
      %28 = sbr.rel (0) target = $region9
    $region8: #{actor_forward.1} parent=1 // pred_region
      %30 = vsyncadd [#allocation5], 0
      %s31 = sshll.u32 %s1, 4
      %s32 = int_to_ptr.hbm [resolvable:$true] %s31
      %s33 = sshll.u32 [#allocation4], 4
      %s34 = int_to_ptr.vmem [resolvable:$true] %s33
      %39 = dma.hbm_to_vmem [thread:$0]  %s32, 256, %s34, [#allocation5], 128, 128, 8
    $region9: #{actor_forward.1} parent=1 // pred_fallthru
      _
    // Predicated region
    $region10: #{actor_forward.1} parent=1 // pred_check
      _
    $region11: #{actor_forward.1} parent=1 // pred_check_branch
      %41 = sbr.rel (0) target = $region13
    $region12: #{actor_forward.1} parent=1 // pred_region
      _
    $region13: #{actor_forward.1} parent=1 // pred_fallthru
      _
    // Predicated region
    $region14: #{actor_forward.1} parent=1 // pred_check
      _
    $region15: #{actor_forward.1} parent=1 // pred_check_branch
      %43 = sbr.rel (0) target = $region17
    $region16: #{actor_forward.1} parent=1 // pred_region
      _
    $region17: #{actor_forward.1} parent=1 // pred_fallthru
      _
    // Predicated region
    $region18: #{actor_forward.1} parent=1 // pred_check
      _
    $region19: #{actor_forward.1} parent=1 // pred_check_branch
      %45 = sbr.rel (0) target = $region21
    $region20: #{actor_forward.1} parent=1 // pred_region
      _
    $region21: #{actor_forward.1} parent=1 // pred_fallthru
      _
    // Predicated region
    $region22: #{actor_forward.1} parent=1 // pred_check
      _
    $region23: #{actor_forward.1} parent=1 // pred_check_branch
      %47 = sbr.rel (0) target = $region25
    $region24: #{actor_forward.1} parent=1 // pred_region
      %49 = vsyncadd [#allocation5], 0
      %s50 = sshll.u32 %s5, 4
      %s51 = int_to_ptr.hbm [resolvable:$true] %s50
      %s52 = sshll.u32 [#allocation6], 4
      %s53 = int_to_ptr.vmem [resolvable:$true] %s52
      %58 = dma.hbm_to_vmem [thread:$0]  %s51, 512, %s53, [#allocation5], 128, 128, 8
    $region25: #{actor_forward.1} parent=1 // pred_fallthru
      _
    // Predicated region
    $region26: #{actor_forward.1} parent=1 // pred_check
      _
    $region27: #{actor_forward.1} parent=1 // pred_check_branch
      %60 = sbr.rel (0) target = $region29
    $region28: #{actor_forward.1} parent=1 // pred_region
      _
    $region29: #{actor_forward.1} parent=1 // pred_fallthru
      _
    // Predicated region
    $region30: #{actor_forward.1} parent=1 // pred_check
      _
    $region31: #{actor_forward.1} parent=1 // pred_check_branch
      %62 = sbr.rel (0) target = $region33
    $region32: #{actor_forward.1} parent=1 // pred_region
      _
    $region33: #{actor_forward.1} parent=1 // pred_fallthru
      _
    // Predicated region
    $region34: #{actor_forward.1} parent=1 // pred_check
      _
    $region35: #{actor_forward.1} parent=1 // pred_check_branch
      %64 = sbr.rel (0) target = $region37
    $region36: #{actor_forward.1} parent=1 // pred_region
      _
    $region37: #{actor_forward.1} parent=1 // pred_fallthru
      _
    // Predicated region
    $region38: #{actor_forward.1} parent=1 // pred_check
      _
    $region39: #{actor_forward.1} parent=1 // pred_check_branch
      %66 = sbr.rel (0) target = $region41
    $region40: #{actor_forward.1} parent=1 // pred_region
      %68 = dma.done [#allocation3], 128
    $region41: #{actor_forward.1} parent=1 // pred_fallthru
      _
    // Predicated region
    $region42: #{actor_forward.1} parent=1 // pred_check
      _
    $region43: #{actor_forward.1} parent=1 // pred_check_branch
      %70 = sbr.rel (0) target = $region45
    $region44: #{actor_forward.1} parent=1 // pred_region
      %72 = dma.done [#allocation5], 256
    $region45: #{actor_forward.1} parent=1 // pred_fallthru
      _
    // Predicated region
    $region46: #{actor_forward.1} parent=1 // pred_check
      _
    $region47: #{actor_forward.1} parent=1 // pred_check_branch
      %74 = sbr.rel (0) target = $region49
    $region48: #{actor_forward.1} parent=1 // pred_region
      %76 = dma.done [#allocation5], 512
    $region49: #{actor_forward.1} parent=1 // pred_fallthru
      _
    %v77 = vld [vmem:[#allocation2] sm:$0xff]
    %v78 = vld [vmem:[#allocation4] sm:$0xff]
    %v79 = vld [vmem:[#allocation4 + $0x8] sm:$0xff]
    %v80 = vld [vmem:[%s2] sm:$0x1]
    %v82 = vperm.slane %v80, 0
    %vm84 = vcmask 130048
    %v86 = vsel %vm84, %v77, 0
    %88 = vmatpush.msra.mxu0 0.0
    %89 = vmatpush.msra.mxu0 0.0
    %90 = vmatpush.msra.mxu0 0.0
    %91 = vmatpush.msra.mxu0 0.0
    %92 = vmatpush.msra.mxu0 0.0
    %93 = vmatpush.msra.mxu0 0.0
    %94 = vmatpush.msra.mxu0 0.0
    %95 = vmatpush.msra.mxu0 0.0
    %96 = vmatpush.msra.mxu0 0.0
    %97 = vmatpush.msra.mxu0 0.0
    %98 = vmatpush.msra.mxu0 0.0
    %99 = vmatpush.msra.mxu0 0.0
    %100 = vmatpush.msra.mxu0 0.0
    %101 = vmatpush.msra.mxu0 0.0
    %102 = vmatpush.msra.mxu0 %v79
    %103 = vmatpush.msra.mxu0 %v78
    %104 = vmatmul.f32.gmra.mxu0 %v86
    %v105 = vpop.f32.mrf.mxu0
    %v106 = vadd.f32 %v82, %v105
    %107 = vdwg.mxu0
    %v108 = vmax.f32 %v106, 0.0
    %v109 = vld [vmem:[%s3] sm:$0xff]
    %v110 = vld [vmem:[%s3 + $0x8] sm:$0xff]
    %v111 = vld [vmem:[%s3 + $0x10] sm:$0xff]
    %v112 = vld [vmem:[%s3 + $0x18] sm:$0xff]
    %v113 = vld [vmem:[%s4] sm:$0x1]
    %v115 = vperm.slane %v113, 0
    %vm117 = vcmask 261120
    %v119 = vsel %vm117, %v108, 0
    %121 = vmatpush.msra.mxu0 0.0
    %122 = vmatpush.msra.mxu0 0.0
    %123 = vmatpush.msra.mxu0 0.0
    %124 = vmatpush.msra.mxu0 0.0
    %125 = vmatpush.msra.mxu0 0.0
    %126 = vmatpush.msra.mxu0 0.0
    %127 = vmatpush.msra.mxu0 0.0
    %128 = vmatpush.msra.mxu0 0.0
    %129 = vmatpush.msra.mxu0 0.0
    %130 = vmatpush.msra.mxu0 0.0
    %131 = vmatpush.msra.mxu0 0.0
    %132 = vmatpush.msra.mxu0 0.0
    %133 = vmatpush.msra.mxu0 %v112
    %134 = vmatpush.msra.mxu0 %v111
    %135 = vmatpush.msra.mxu0 %v110
    %136 = vmatpush.msra.mxu0 %v109
    %137 = vmatmul.f32.gmra.mxu0 %v119
    %v138 = vpop.f32.mrf.mxu0
    %v139 = vadd.f32 %v115, %v138
    %140 = vdwg.mxu0
    %v141 = vmax.f32 %v139, 0.0
    %v142 = vld [vmem:[#allocation6] sm:$0xff]
    %v143 = vld [vmem:[#allocation6 + $0x8] sm:$0xff]
    %v144 = vld [vmem:[#allocation6 + $0x10] sm:$0xff]
    %v145 = vld [vmem:[#allocation6 + $0x18] sm:$0xff]
    %v146 = vld [vmem:[%s6] sm:$0x1]
    %v148 = vperm.slane %v146, 0
    %v151 = vsel %vm117, %v141, 0
    %153 = vmatpush.msra.mxu0 0.0
    %154 = vmatpush.msra.mxu0 0.0
    %155 = vmatpush.msra.mxu0 0.0
    %156 = vmatpush.msra.mxu0 0.0
    %157 = vmatpush.msra.mxu0 0.0
    %158 = vmatpush.msra.mxu0 0.0
    %159 = vmatpush.msra.mxu0 0.0
    %160 = vmatpush.msra.mxu0 0.0
    %161 = vmatpush.msra.mxu0 0.0
    %162 = vmatpush.msra.mxu0 0.0
    %163 = vmatpush.msra.mxu0 0.0
    %164 = vmatpush.msra.mxu0 0.0
    %165 = vmatpush.msra.mxu0 %v145
    %166 = vmatpush.msra.mxu0 %v144
    %167 = vmatpush.msra.mxu0 %v143
    %168 = vmatpush.msra.mxu0 %v142
    %169 = vmatmul.f32.gmra.mxu0 %v151
    %v170 = vpop.f32.mrf.mxu0
    %v171 = vadd.f32 %v148, %v170
    %172 = vdwg.mxu0
    %v173 = vmax.f32 %v171, 0.0
    %v174 = vld [vmem:[%s7] sm:$0xff]
    %v175 = vld [vmem:[%s7 + $0x8] sm:$0xff]
    %v176 = vld [vmem:[%s7 + $0x10] sm:$0xff]
    %v177 = vld [vmem:[%s7 + $0x18] sm:$0xff]
    %v178 = vld [vmem:[%s8] sm:$0x1]
    %v180 = vperm.slane %v178, 0
    %v183 = vsel %vm117, %v173, 0
    %185 = vmatpush.msra.mxu0 0.0
    %186 = vmatpush.msra.mxu0 0.0
    %187 = vmatpush.msra.mxu0 0.0
    %188 = vmatpush.msra.mxu0 0.0
    %189 = vmatpush.msra.mxu0 0.0
    %190 = vmatpush.msra.mxu0 0.0
    %191 = vmatpush.msra.mxu0 0.0
    %192 = vmatpush.msra.mxu0 0.0
    %193 = vmatpush.msra.mxu0 0.0
    %194 = vmatpush.msra.mxu0 0.0
    %195 = vmatpush.msra.mxu0 0.0
    %196 = vmatpush.msra.mxu0 0.0
    %197 = vmatpush.msra.mxu0 %v177
    %198 = vmatpush.msra.mxu0 %v176
    %199 = vmatpush.msra.mxu0 %v175
    %200 = vmatpush.msra.mxu0 %v174
    %201 = vmatmul.f32.gmra.mxu0 %v183
    %v202 = vpop.f32.mrf.mxu0
    %v203 = vadd.f32 %v180, %v202
    %204 = vdwg.mxu0
    %vm205 = vcmask 31744
    %206 = vst.msk [vmem:[%s9] sm:$0xff] %vm205, %v203
    // Predicated region
    $region50: #{actor_forward.1} parent=1 // pred_check
      _
    $region51: #{actor_forward.1} parent=1 // pred_check_branch
      %208 = sbr.rel (0) target = $region53
    $region52: #{actor_forward.1} parent=1 // pred_region
      _
    $region53: #{actor_forward.1} parent=1 // pred_fallthru
      _
    // Predicated region
    $region54: #{actor_forward.1} parent=1 // pred_check
      _
    $region55: #{actor_forward.1} parent=1 // pred_check_branch
      %210 = sbr.rel (0) target = $region57
    $region56: #{actor_forward.1} parent=1 // pred_region
      _
    $region57: #{actor_forward.1} parent=1 // pred_fallthru
      _
    %211 = vsyncpa [#allocation3], 1
    %212 = vsyncpa [#allocation5], 1

</llo_original>
